<compile_context>
chip_gen: v7x
topology: tpu7x:2x2x1
jax: 0.10.0
libtpu: 0.0.40
codegen_flags: <defaults>
</compile_context>

<pallas_src>
import jax
import jax.numpy as jnp
from jax.experimental import pallas as pl
from jax.experimental.pallas import tpu as pltpu

HIDDEN = 128  # fixed by the module definition


# ----------------------------------------------------------------------------
# helpers
# ----------------------------------------------------------------------------
def _round_up(v, m):
    return ((v + m - 1) // m) * m


def _tpu_vmem_capacity():
    try:
        return int(pltpu.get_tpu_info().vmem_capacity_bytes)
    except Exception:
        return 64 << 20  # smallest per-TC VMEM across v5e/v6e/v7x (v7x)


def _vmem_budget(cap):
    # Tile-sizing budget: large tiles amortize the ~0.35us/grid-step overhead and
    # push HBM utilization toward roofline, while staying clear of v7x's 64 MiB.
    return int(min(cap // 3, 40 << 20))


def _vmem_limit(cap):
    # Explicit scoped-VMEM limit, raised past the generation defaults but safely
    # below physical capacity.
    return int(min(int(cap * 0.7), 96 << 20))


# ----------------------------------------------------------------------------
# kernels
# ----------------------------------------------------------------------------
def _mlp_kernel_fm(x_ref, t_ref, w1xT_ref, w1tT_ref, b1T_ref, w2T_ref, b2T_ref, o_ref):
    # Feature-major (lane-dense) layout: batch on the 128-lane axis.
    #   x_ref:   [D, TB]     t_ref:   [1, TB]
    #   w1xT_ref:[128, D]    w1tT_ref:[128, 1]   b1T_ref:[128, 1]
    #   w2T_ref: [D, 128]    b2T_ref: [D, 1]     o_ref:  [D, TB]
    xT = x_ref[...]
    tT = t_ref[...]
    # Layer 1: MXU matmul over x features + fused rank-1 timestep term
    # ([128,1] * [1,TB] outer-product broadcast on the VPU, essentially free).
    h = jnp.dot(w1xT_ref[...], xT, preferred_element_type=jnp.float32)   # [128, TB]
    h = h + w1tT_ref[...] * tT + b1T_ref[...]
    h = jnp.maximum(h, 0.0)                                              # ReLU in f32
    # Layer 2.
    y = jnp.dot(w2T_ref[...], h, preferred_element_type=jnp.float32) + b2T_ref[...]
    o_ref[...] = y.astype(o_ref.dtype)                                   # dense lane-wide stores


def _mlp_kernel_bm(x_ref, t_ref, w1x_ref, w1t_ref, b1_ref, w2_ref, b2_ref, o_ref):
    # Batch-major layout (used when data_dim >= 128, output already lane-dense).
    #   x_ref:  [TB, D]    t_ref:  [TB, 1]
    #   w1x_ref:[D, 128]   w1t_ref:[1, 128]   b1_ref:[1, 128]
    #   w2_ref: [128, D]   b2_ref: [1, D]     o_ref: [TB, D]
    x = x_ref[...]
    t = t_ref[...]
    h = jnp.dot(x, w1x_ref[...], preferred_element_type=jnp.float32)
    h = h + t * w1t_ref[...] + b1_ref[...]
    h = jnp.maximum(h, 0.0)
    y = jnp.dot(h, w2_ref[...], preferred_element_type=jnp.float32) + b2_ref[...]
    o_ref[...] = y.astype(o_ref.dtype)


# ----------------------------------------------------------------------------
# tile-size pickers (generation-aware via VMEM capacity)
# ----------------------------------------------------------------------------
def _pick_block_cols(batch, data_dim, budget):
    """Lane-axis (batch) tile for the feature-major kernel."""
    d_sub = _round_up(data_dim, 8)
    d_lane = _round_up(data_dim, 128)
    # f32 bytes of VMEM per batch element:
    per_col = 4 * (2 * d_sub        # x block, double-buffered
                   + 2 * d_sub      # out block, double-buffered
                   + 2 * 8          # t row (sublane-padded), double-buffered
                   + 2 * HIDDEN     # hidden activation + MXU-result copy
                   + d_sub)         # y tile before the store
    # resident weights/biases (double-buffered by default) + slack
    fixed = 8 * (HIDDEN * d_lane + d_sub * HIDDEN + 4 * HIDDEN * HIDDEN) + (1 << 20)
    tb = max((budget - fixed) // per_col, 128)
    tb = (tb // 128) * 128
    if batch >= 256:
        # >=2 grid steps so v7x's second TensorCore gets work (near-neutral on v5e/v6e).
        tb = min(tb, max(128, ((batch // 2) // 128) * 128))
    if tb >= batch:
        tb = batch  # single full-extent block (exempt from 128-divisibility)
    return int(tb)


def _pick_block_rows(batch, data_dim, budget):
    """Sublane-axis (batch) tile for the batch-major kernel (data_dim >= 128)."""
    d_sub = _round_up(data_dim, 8)
    d_lane = _round_up(data_dim, 128)
    per_row = 4 * (2 * d_lane       # x block, double-buffered
                   + 2 * d_lane     # out block, double-buffered
                   + 2 * 128        # t column (lane-padded), double-buffered
                   + 2 * HIDDEN     # hidden activation + MXU-result copy
                   + d_lane)        # y tile before the store
    fixed = 8 * (d_sub * HIDDEN + HIDDEN * d_lane + 16 * d_lane + 16 * HIDDEN) + (1 << 20)
    tb = max((budget - fixed) // per_row, 8)
    tb = (tb // 8) * 8
    if batch >= 256:
        tb = min(tb, max(8, ((batch // 2) // 8) * 8))  # >=2 grid steps (v7x megacore)
    if tb >= batch:
        tb = batch
    return int(tb)


# ----------------------------------------------------------------------------
# wrappers
# ----------------------------------------------------------------------------
def prepare_fm_params(params, data_dim):
    """One-time transpose of the (tiny) weights into the feature-major layout."""
    w1, b1, w2, b2 = params["w1"], params["b1"], params["w2"], params["b2"]
    return {
        "w1xT": jnp.asarray(w1[:data_dim].T),               # [128, D]
        "w1tT": jnp.asarray(w1[data_dim:data_dim + 1].T),   # [128, 1]
        "b1T": jnp.asarray(b1).reshape(HIDDEN, 1),          # [128, 1]
        "w2T": jnp.asarray(w2.T),                           # [D, 128]
        "b2T": jnp.asarray(b2).reshape(data_dim, 1),        # [D, 1]
    }


def simple_diffusion_forward_fm(x_fm, t, fm_params, block_cols=None):
    """Lane-dense path, preferred when data_dim < 128.

    x_fm: [D, B] float32 (feature-major — keep this layout in calling code so no
          XLA transpose pass is needed in front of the kernel).
    t:    [B] float32.
    Returns y_fm: [D, B].
    """
    D, B = x_fm.shape
    t_row = t.reshape(1, B)

    cap = _tpu_vmem_capacity()
    tb = block_cols if block_cols is not None else _pick_block_cols(B, D, _vmem_budget(cap))
    tb = int(tb)
    assert tb == B or tb % 128 == 0, "block_cols must be a multiple of 128 (or == batch)"

    grid = (pl.cdiv(B, tb),)  # ragged final block is masked by Pallas (no pad / slice)

    # TODO(synk): for large data_dim on v7x, mark the constant-index weight specs with
    # pipeline_mode=pl.Buffered(1) so they are not double-buffered in the tighter 64 MiB VMEM.
    # TODO(synk): optionally stream x/out (and weights) as bf16 on v6e/v7x for ~2x bandwidth
    # headroom while keeping f32 accumulation; gate behind an accuracy check.
    return pl.pallas_call(
        _mlp_kernel_fm,
        out_shape=jax.ShapeDtypeStruct((D, B), x_fm.dtype),
        grid=grid,
        in_specs=[
            pl.BlockSpec((D, tb), lambda i: (0, i)),         # x  (streamed, lane-dense)
            pl.BlockSpec((1, tb), lambda i: (0, i)),         # t  (streamed)
            pl.BlockSpec((HIDDEN, D), lambda i: (0, 0)),     # w1xT (resident in VMEM)
            pl.BlockSpec((HIDDEN, 1), lambda i: (0, 0)),     # w1tT (resident)
            pl.BlockSpec((HIDDEN, 1), lambda i: (0, 0)),     # b1T  (resident)
            pl.BlockSpec((D, HIDDEN), lambda i: (0, 0)),     # w2T  (resident)
            pl.BlockSpec((D, 1), lambda i: (0, 0)),          # b2T  (resident)
        ],
        out_specs=pl.BlockSpec((D, tb), lambda i: (0, i)),   # y (dense lane-wide stores)
        compiler_params=pltpu.CompilerParams(
            dimension_semantics=("parallel",),               # batch axis: megacore-splittable
            vmem_limit_bytes=_vmem_limit(cap),
        ),
    )(x_fm, t_row, fm_params["w1xT"], fm_params["w1tT"], fm_params["b1T"],
      fm_params["w2T"], fm_params["b2T"])


def simple_diffusion_forward(x, t, params, block_rows=None):
    """Batch-major path matching the PyTorch interface (best when data_dim >= 128).

    x: [B, D] float32, t: [B] float32.  For data_dim < 128 prefer the feature-major
    entry point `simple_diffusion_forward_fm` (lane-dense blocks).
    """
    w1, b1, w2, b2 = params["w1"], params["b1"], params["w2"], params["b2"]
    B, D = x.shape
    w1x = w1[:D]           # [D, 128]
    w1t = w1[D:D + 1]      # [1, 128]
    t_col = t.reshape(B, 1)

    cap = _tpu_vmem_capacity()
    tb = block_rows if block_rows is not None else _pick_block_rows(B, D, _vmem_budget(cap))
    tb = int(tb)
    assert tb == B or tb % 8 == 0, "block_rows must be a multiple of 8 (or == batch)"

    grid = (pl.cdiv(B, tb),)  # ragged final block is masked by Pallas (no pad / slice)

    return pl.pallas_call(
        _mlp_kernel_bm,
        out_shape=jax.ShapeDtypeStruct((B, D), x.dtype),
        grid=grid,
        in_specs=[
            pl.BlockSpec((tb, D), lambda i: (i, 0)),         # x tile (streamed)
            pl.BlockSpec((tb, 1), lambda i: (i, 0)),         # t tile (streamed)
            pl.BlockSpec((D, HIDDEN), lambda i: (0, 0)),     # w1x (resident)
            pl.BlockSpec((1, HIDDEN), lambda i: (0, 0)),     # w1t (resident)
            pl.BlockSpec((1, HIDDEN), lambda i: (0, 0)),     # b1  (resident)
            pl.BlockSpec((HIDDEN, D), lambda i: (0, 0)),     # w2  (resident)
            pl.BlockSpec((1, D), lambda i: (0, 0)),          # b2  (resident)
        ],
        out_specs=pl.BlockSpec((tb, D), lambda i: (i, 0)),
        compiler_params=pltpu.CompilerParams(
            dimension_semantics=("parallel",),
            vmem_limit_bytes=_vmem_limit(cap),
        ),
    )(x, t_col, w1x, w1t, b1, w2, b2)


# ----------------------------------------------------------------------------
# params / reference
# ----------------------------------------------------------------------------
def init_params(key, data_dim):
    """Deterministic synthetic init matching nn.Linear shapes (stored transposed)."""
    k1, k2, k3, k4 = jax.random.split(key, 4)
    in1 = data_dim + 1
    w1 = jax.random.normal(k1, (in1, HIDDEN), jnp.float32) * (1.0 / jnp.sqrt(in1))
    b1 = jax.random.normal(k2, (1, HIDDEN), jnp.float32) * 0.01
    w2 = jax.random.normal(k3, (HIDDEN, data_dim), jnp.float32) * (1.0 / jnp.sqrt(HIDDEN))
    b2 = jax.random.normal(k4, (1, data_dim), jnp.float32) * 0.01
    return {"w1": w1, "b1": b1, "w2": w2, "b2": b2}


def _reference(x, t, params):
    # Mirrors the PyTorch module exactly (including the concat).
    x_cat = jnp.concatenate([x, t[:, None]], axis=1)
    h = jnp.maximum(x_cat @ params["w1"] + params["b1"], 0.0)
    return h @ params["w2"] + params["b2"]


if __name__ == "__main__":
    key = jax.random.PRNGKey(0)
    k1, k2, k3, k4, k5, k6 = jax.random.split(key, 6)

    # ---- lane-dense / feature-major path (data_dim < 128) -------------------
    D, B = 16, 400
    x_fm = jax.random.normal(k1, (D, B), jnp.float32)   # kept feature-major end-to-end
    t = jax.random.uniform(k2, (B,), jnp.float32)
    params = init_params(k3, D)
    fm_params = prepare_fm_params(params, D)

    y_fm = simple_diffusion_forward_fm(x_fm, t, fm_params)                    # auto-picked tile
    y_fm_tiled = simple_diffusion_forward_fm(x_fm, t, fm_params, block_cols=256)  # 2-step grid, ragged last block
    jax.block_until_ready((y_fm, y_fm_tiled))

    ref_fm = _reference(x_fm.T, t, params).T
    assert y_fm.shape == (D, B)
    assert jnp.allclose(y_fm, ref_fm, atol=5e-5, rtol=5e-5), "fm mismatch vs reference"
    assert jnp.allclose(y_fm_tiled, ref_fm, atol=5e-5, rtol=5e-5), "fm tiled mismatch vs reference"

    # ---- batch-major path (data_dim >= 128) ----------------------------------
    D2, B2 = 128, 100
    x2 = jax.random.normal(k4, (B2, D2), jnp.float32)
    t2 = jax.random.uniform(k5, (B2,), jnp.float32)
    params2 = init_params(k6, D2)

    y2 = simple_diffusion_forward(x2, t2, params2, block_rows=32)  # 4-step grid, ragged last block
    y2 = jax.block_until_ready(y2)

    ref2 = _reference(x2, t2, params2)
    assert y2.shape == (B2, D2)
    assert jnp.allclose(y2, ref2, atol=5e-5, rtol=5e-5), "bm mismatch vs reference"

    print("KERNEL_OK")
</pallas_src>

<mosaic_0001>
module attributes {stable_mosaic.version = 11 : i64} {
  func.func @_mlp_kernel_fm(%arg0: i32, %arg1: memref<16x128xf32, #tpu.memory_space<vmem>>, %arg2: memref<1x128xf32, #tpu.memory_space<vmem>>, %arg3: memref<128x16xf32, #tpu.memory_space<vmem>>, %arg4: memref<128x1xf32, #tpu.memory_space<vmem>>, %arg5: memref<128x1xf32, #tpu.memory_space<vmem>>, %arg6: memref<16x128xf32, #tpu.memory_space<vmem>>, %arg7: memref<16x1xf32, #tpu.memory_space<vmem>>, %arg8: memref<16x128xf32, #tpu.memory_space<vmem>>) attributes {dimension_semantics = [#tpu.dimension_semantics<parallel>], iteration_bounds = array<i64: 4>, scalar_prefetch = 0 : i64, scratch_operands = 0 : i64, tpu.core_type = #tpu.core_type<tc>, window_params = [{transform_indices = @transform_0, window_bounds = array<i64: 16, 128>}, {transform_indices = @transform_1, window_bounds = array<i64: 1, 128>}, {pipeline_mode = #tpu.pipeline_mode<synchronous>, transform_indices = @transform_2, window_bounds = array<i64: 128, 16>}, {pipeline_mode = #tpu.pipeline_mode<synchronous>, transform_indices = @transform_3, window_bounds = array<i64: 128, 1>}, {pipeline_mode = #tpu.pipeline_mode<synchronous>, transform_indices = @transform_4, window_bounds = array<i64: 128, 1>}, {pipeline_mode = #tpu.pipeline_mode<synchronous>, transform_indices = @transform_5, window_bounds = array<i64: 16, 128>}, {pipeline_mode = #tpu.pipeline_mode<synchronous>, transform_indices = @transform_6, window_bounds = array<i64: 16, 1>}, {transform_indices = @transform_7, window_bounds = array<i64: 16, 128>}]} {
    %c0 = arith.constant 0 : index
    %c0_0 = arith.constant 0 : index
    %0 = vector.load %arg1[%c0, %c0_0] : memref<16x128xf32, #tpu.memory_space<vmem>>, vector<16x128xf32>
    %c0_1 = arith.constant 0 : index
    %c0_2 = arith.constant 0 : index
    %1 = vector.load %arg2[%c0_1, %c0_2] : memref<1x128xf32, #tpu.memory_space<vmem>>, vector<1x128xf32>
    %c0_3 = arith.constant 0 : index
    %c0_4 = arith.constant 0 : index
    %2 = vector.load %arg3[%c0_3, %c0_4] : memref<128x16xf32, #tpu.memory_space<vmem>>, vector<128x16xf32>
    %cst = arith.constant dense<0.000000e+00> : vector<128x128xf32>
    %3 = tpu.matmul %2, %0, %cst {dimension_numbers = #tpu.dot_dimension_numbers<[1], [0], [0], [1], [0, 0, 1, 1], [], []>} : vector<128x16xf32>, vector<16x128xf32>, vector<128x128xf32> -> vector<128x128xf32>
    %c0_5 = arith.constant 0 : index
    %c0_6 = arith.constant 0 : index
    %4 = vector.load %arg4[%c0_5, %c0_6] : memref<128x1xf32, #tpu.memory_space<vmem>>, vector<128x1xf32>
    %5 = vector.broadcast %4 : vector<128x1xf32> to vector<128x128xf32>
    %6 = vector.broadcast %1 : vector<1x128xf32> to vector<128x128xf32>
    %7 = arith.mulf %5, %6 : vector<128x128xf32>
    %8 = arith.addf %3, %7 : vector<128x128xf32>
    %c0_7 = arith.constant 0 : index
    %c0_8 = arith.constant 0 : index
    %9 = vector.load %arg5[%c0_7, %c0_8] : memref<128x1xf32, #tpu.memory_space<vmem>>, vector<128x1xf32>
    %10 = vector.broadcast %9 : vector<128x1xf32> to vector<128x128xf32>
    %11 = arith.addf %8, %10 : vector<128x128xf32>
    %cst_9 = arith.constant 0.000000e+00 : f32
    %12 = vector.broadcast %cst_9 : f32 to vector<128x128xf32>
    %13 = arith.maximumf %11, %12 : vector<128x128xf32>
    %c0_10 = arith.constant 0 : index
    %c0_11 = arith.constant 0 : index
    %14 = vector.load %arg6[%c0_10, %c0_11] : memref<16x128xf32, #tpu.memory_space<vmem>>, vector<16x128xf32>
    %cst_12 = arith.constant dense<0.000000e+00> : vector<16x128xf32>
    %15 = tpu.matmul %14, %13, %cst_12 {dimension_numbers = #tpu.dot_dimension_numbers<[1], [0], [0], [1], [0, 0, 1, 1], [], []>} : vector<16x128xf32>, vector<128x128xf32>, vector<16x128xf32> -> vector<16x128xf32>
    %c0_13 = arith.constant 0 : index
    %c0_14 = arith.constant 0 : index
    %16 = vector.load %arg7[%c0_13, %c0_14] : memref<16x1xf32, #tpu.memory_space<vmem>>, vector<16x1xf32>
    %17 = vector.broadcast %16 : vector<16x1xf32> to vector<16x128xf32>
    %18 = arith.addf %15, %17 : vector<16x128xf32>
    %c0_15 = arith.constant 0 : index
    %c0_16 = arith.constant 0 : index
    %19 = vector.load %arg8[%c0_15, %c0_16] : memref<16x128xf32, #tpu.memory_space<vmem>>, vector<16x128xf32>
    tpu.vector_store %arg8[%c0_15, %c0_16], %18 {strides = array<i32>} : memref<16x128xf32, #tpu.memory_space<vmem>>, vector<16x128xf32>,
    return
  }
  func.func @transform_0(%arg0: i32) -> (i32, i32) {
    %c0_i32 = arith.constant 0 : i32
    %c0_i32_0 = arith.constant 0 : i32
    return %c0_i32, %arg0 : i32, i32
  }
  func.func @transform_1(%arg0: i32) -> (i32, i32) {
    %c0_i32 = arith.constant 0 : i32
    %c0_i32_0 = arith.constant 0 : i32
    return %c0_i32, %arg0 : i32, i32
  }
  func.func @transform_2(%arg0: i32) -> (i32, i32) {
    %c0_i32 = arith.constant 0 : i32
    %c0_i32_0 = arith.constant 0 : i32
    %c0_i32_1 = arith.constant 0 : i32
    return %c0_i32, %c0_i32_0 : i32, i32
  }
  func.func @transform_3(%arg0: i32) -> (i32, i32) {
    %c0_i32 = arith.constant 0 : i32
    %c0_i32_0 = arith.constant 0 : i32
    %c0_i32_1 = arith.constant 0 : i32
    return %c0_i32, %c0_i32_0 : i32, i32
  }
  func.func @transform_4(%arg0: i32) -> (i32, i32) {
    %c0_i32 = arith.constant 0 : i32
    %c0_i32_0 = arith.constant 0 : i32
    %c0_i32_1 = arith.constant 0 : i32
    return %c0_i32, %c0_i32_0 : i32, i32
  }
  func.func @transform_5(%arg0: i32) -> (i32, i32) {
    %c0_i32 = arith.constant 0 : i32
    %c0_i32_0 = arith.constant 0 : i32
    %c0_i32_1 = arith.constant 0 : i32
    return %c0_i32, %c0_i32_0 : i32, i32
  }
  func.func @transform_6(%arg0: i32) -> (i32, i32) {
    %c0_i32 = arith.constant 0 : i32
    %c0_i32_0 = arith.constant 0 : i32
    %c0_i32_1 = arith.constant 0 : i32
    return %c0_i32, %c0_i32_0 : i32, i32
  }
  func.func @transform_7(%arg0: i32) -> (i32, i32) {
    %c0_i32 = arith.constant 0 : i32
    %c0_i32_0 = arith.constant 0 : i32
    return %c0_i32, %arg0 : i32, i32
  }
}

</mosaic_0001>

<llo_original>
// kernel: tpu_custom_call.1
$region0: #{tpu_custom_call.1}
  #allocation0 [shape = 'u32[]', space=smem, size = 0x4, offset = 0x4, fixed_abs, tag = 'smem constant byte address 0x4 - core index']
  #allocation1 [shape = 'u32[144,128]{1,0:T(1,128)}', space=vmem, size = 0x12000, scoped, tag = 'internal scratch']
  %s0 = inlined_call_operand.vmem [shape: f32[16,400], index: 0, kind: input, shape index: {}]
  %s1 = inlined_call_operand.vmem [shape: f32[1,400], index: 1, kind: input, shape index: {}]
  %s2 = inlined_call_operand.vmem [shape: f32[128,16], index: 2, kind: input, shape index: {}]
  %s3 = inlined_call_operand.vmem [shape: f32[128,1], index: 3, kind: input, shape index: {}]
  %s4 = inlined_call_operand.vmem [shape: f32[128,1], index: 4, kind: input, shape index: {}]
  %s5 = inlined_call_operand.vmem [shape: f32[16,128], index: 5, kind: input, shape index: {}]
  %s6 = inlined_call_operand.vmem [shape: f32[16,1], index: 6, kind: input, shape index: {}]
  %s7 = inlined_call_operand.hbm [shape: f32[16,400], index: 7, kind: output, shape index: {}]
  %s8 = sld [smem:[#allocation0]]
  $region99: #{tpu_custom_call.1} parent=0
    _
  %s10 = ssub.s32 1, %s8
  %s11 = scalar_select 0, %s10, %s8
  $region1: #{tpu_custom_call.1} parent=0
    #allocation2 [shape = 'u8[16384]{0}', space=vmem, size = 0x4000, scoped, tag = 'input window, operand 0']
    #allocation3 [shape = 'u8[16384]{0}', space=vmem, size = 0x4000, scoped, tag = 'output window, operand 0']
    #allocation4 [shape = 's32[2]{0}', space=sflag, size = 0x8, scoped, tag = 'scoped memory for tpu_custom_call.1']
    %12 = vsyncpa [#allocation4], 0
    %s13 = scalar_lea.sflag [#allocation4], 1
    %14 = vsyncpa %s13, 0
    loop: start=0, step=1, limit=6
    $region2: #{tpu_custom_call.1} parent=1 // loop_pre_header
      _
    $region3: #{tpu_custom_call.1} parent=1 // loop_header
      %s16 = sphi 0, %s20
      %p17 = scmp.ge.s32.totalorder %s16, 6
      %s26 = sphi 0, %s28
      %s29 = sphi 0, %s26
      %s30 = sphi 0, %s29
      %s46 = sphi 0, %s30
      %s52 = sphi 0, %s54
      %s55 = sphi 0, %s52
      %s56 = sphi 0, %s55
      %s72 = sphi 0, %s56
      %s76 = sphi 0, %s76
      %s78 = sphi 0, %s76
      %s79 = sphi 0, %s78
      %s93 = sphi 0, %s79
      %s97 = sphi 0, %s97
      %s99 = sphi 0, %s97
      %s100 = sphi 0, %s99
      %s114 = sphi 0, %s100
      %s118 = sphi 0, %s118
      %s120 = sphi 0, %s118
      %s121 = sphi 0, %s120
      %s135 = sphi 0, %s121
      %s139 = sphi 0, %s139
      %s141 = sphi 0, %s139
      %s142 = sphi 0, %s141
      %s156 = sphi 0, %s142
      %s160 = sphi 0, %s160
      %s162 = sphi 0, %s160
      %s163 = sphi 0, %s162
      %s177 = sphi 0, %s163
      %s183 = sphi 0, %s185
      %s186 = sphi 0, %s183
      %s187 = sphi 0, %s186
      %s203 = sphi 0, %s187
    $region4: #{tpu_custom_call.1} parent=1 // loop_header_branch
      %19 = sbr.rel (%p17) target = $region8
    $region5: #{tpu_custom_call.1} parent=1 // loop_body
      %s21 = ssub.s32 %s16, 1
      %s22 = ssub.s32 %s16, 2
      %s23 = sadd.s32 %s16, 1
      %s24 = ssub.s32 %s16, %s23
      %p25 = scmp.eq.s32.totalorder %s24, 0
      %s27 = sadd.s32 %s26, 1
      %s28 = scalar_select %p25, %s26, %s27
      %p31 = pneg %p25
      %p32 = scmp.eq.s32.totalorder %s16, 3
      %p33 = por %p31, %p32
      %p34 = scmp.ne.s32.totalorder %s26, %s29
      %p35 = scmp.eq.s32.totalorder %s16, 0
      %p36 = por %p34, %p35
      %p37 = scmp.ne.s32.totalorder %s26, %s29
      %p38 = scmp.eq.s32.totalorder %s21, 3
      %p39 = por %p37, %p38
      %p40 = scmp.ne.s32.totalorder %s29, %s30
      %p41 = scmp.eq.s32.totalorder %s21, 0
      %p42 = por %p40, %p41
      %p43 = scmp.ne.s32.totalorder %s29, %s30
      %p44 = scmp.eq.s32.totalorder %s22, 3
      %p45 = por %p43, %p44
      %p47 = scmp.ne.s32.totalorder %s30, %s46
      %p48 = scmp.eq.s32.totalorder %s22, 0
      %p49 = por %p47, %p48
      %s50 = ssub.s32 %s16, %s23
      %p51 = scmp.eq.s32.totalorder %s50, 0
      %s53 = sadd.s32 %s52, 1
      %s54 = scalar_select %p51, %s52, %s53
      %p57 = pneg %p51
      %p58 = scmp.eq.s32.totalorder %s16, 3
      %p59 = por %p57, %p58
      %p60 = scmp.ne.s32.totalorder %s52, %s55
      %p61 = scmp.eq.s32.totalorder %s16, 0
      %p62 = por %p60, %p61
      %p63 = scmp.ne.s32.totalorder %s52, %s55
      %p64 = scmp.eq.s32.totalorder %s21, 3
      %p65 = por %p63, %p64
      %p66 = scmp.ne.s32.totalorder %s55, %s56
      %p67 = scmp.eq.s32.totalorder %s21, 0
      %p68 = por %p66, %p67
      %p69 = scmp.ne.s32.totalorder %s55, %s56
      %p70 = scmp.eq.s32.totalorder %s22, 3
      %p71 = por %p69, %p70
      %p73 = scmp.ne.s32.totalorder %s56, %s72
      %p74 = scmp.eq.s32.totalorder %s22, 0
      %p75 = por %p73, %p74
      %s77 = sadd.s32 %s76, 1
      %p80 = scmp.eq.s32.totalorder %s16, 3
      %p81 = scmp.ne.s32.totalorder %s76, %s78
      %p82 = scmp.eq.s32.totalorder %s16, 0
      %p83 = por %p81, %p82
      %p84 = scmp.ne.s32.totalorder %s76, %s78
      %p85 = scmp.eq.s32.totalorder %s21, 3
      %p86 = por %p84, %p85
      %p87 = scmp.ne.s32.totalorder %s78, %s79
      %p88 = scmp.eq.s32.totalorder %s21, 0
      %p89 = por %p87, %p88
      %p90 = scmp.ne.s32.totalorder %s78, %s79
      %p91 = scmp.eq.s32.totalorder %s22, 3
      %p92 = por %p90, %p91
      %p94 = scmp.ne.s32.totalorder %s79, %s93
      %p95 = scmp.eq.s32.totalorder %s22, 0
      %p96 = por %p94, %p95
      %s98 = sadd.s32 %s97, 1
      %p101 = scmp.eq.s32.totalorder %s16, 3
      %p102 = scmp.ne.s32.totalorder %s97, %s99
      %p103 = scmp.eq.s32.totalorder %s16, 0
      %p104 = por %p102, %p103
      %p105 = scmp.ne.s32.totalorder %s97, %s99
      %p106 = scmp.eq.s32.totalorder %s21, 3
      %p107 = por %p105, %p106
      %p108 = scmp.ne.s32.totalorder %s99, %s100
      %p109 = scmp.eq.s32.totalorder %s21, 0
      %p110 = por %p108, %p109
      %p111 = scmp.ne.s32.totalorder %s99, %s100
      %p112 = scmp.eq.s32.totalorder %s22, 3
      %p113 = por %p111, %p112
      %p115 = scmp.ne.s32.totalorder %s100, %s114
      %p116 = scmp.eq.s32.totalorder %s22, 0
      %p117 = por %p115, %p116
      %s119 = sadd.s32 %s118, 1
      %p122 = scmp.eq.s32.totalorder %s16, 3
      %p123 = scmp.ne.s32.totalorder %s118, %s120
      %p124 = scmp.eq.s32.totalorder %s16, 0
      %p125 = por %p123, %p124
      %p126 = scmp.ne.s32.totalorder %s118, %s120
      %p127 = scmp.eq.s32.totalorder %s21, 3
      %p128 = por %p126, %p127
      %p129 = scmp.ne.s32.totalorder %s120, %s121
      %p130 = scmp.eq.s32.totalorder %s21, 0
      %p131 = por %p129, %p130
      %p132 = scmp.ne.s32.totalorder %s120, %s121
      %p133 = scmp.eq.s32.totalorder %s22, 3
      %p134 = por %p132, %p133
      %p136 = scmp.ne.s32.totalorder %s121, %s135
      %p137 = scmp.eq.s32.totalorder %s22, 0
      %p138 = por %p136, %p137
      %s140 = sadd.s32 %s139, 1
      %p143 = scmp.eq.s32.totalorder %s16, 3
      %p144 = scmp.ne.s32.totalorder %s139, %s141
      %p145 = scmp.eq.s32.totalorder %s16, 0
      %p146 = por %p144, %p145
      %p147 = scmp.ne.s32.totalorder %s139, %s141
      %p148 = scmp.eq.s32.totalorder %s21, 3
      %p149 = por %p147, %p148
      %p150 = scmp.ne.s32.totalorder %s141, %s142
      %p151 = scmp.eq.s32.totalorder %s21, 0
      %p152 = por %p150, %p151
      %p153 = scmp.ne.s32.totalorder %s141, %s142
      %p154 = scmp.eq.s32.totalorder %s22, 3
      %p155 = por %p153, %p154
      %p157 = scmp.ne.s32.totalorder %s142, %s156
      %p158 = scmp.eq.s32.totalorder %s22, 0
      %p159 = por %p157, %p158
      %s161 = sadd.s32 %s160, 1
      %p164 = scmp.eq.s32.totalorder %s16, 3
      %p165 = scmp.ne.s32.totalorder %s160, %s162
      %p166 = scmp.eq.s32.totalorder %s16, 0
      %p167 = por %p165, %p166
      %p168 = scmp.ne.s32.totalorder %s160, %s162
      %p169 = scmp.eq.s32.totalorder %s21, 3
      %p170 = por %p168, %p169
      %p171 = scmp.ne.s32.totalorder %s162, %s163
      %p172 = scmp.eq.s32.totalorder %s21, 0
      %p173 = por %p171, %p172
      %p174 = scmp.ne.s32.totalorder %s162, %s163
      %p175 = scmp.eq.s32.totalorder %s22, 3
      %p176 = por %p174, %p175
      %p178 = scmp.ne.s32.totalorder %s163, %s177
      %p179 = scmp.eq.s32.totalorder %s22, 0
      %p180 = por %p178, %p179
      %s181 = ssub.s32 %s16, %s23
      %p182 = scmp.eq.s32.totalorder %s181, 0
      %s184 = sadd.s32 %s183, 1
      %s185 = scalar_select %p182, %s183, %s184
      %p188 = pneg %p182
      %p189 = scmp.eq.s32.totalorder %s16, 3
      %p190 = por %p188, %p189
      %p191 = scmp.ne.s32.totalorder %s183, %s186
      %p192 = scmp.eq.s32.totalorder %s16, 0
      %p193 = por %p191, %p192
      %p194 = scmp.ne.s32.totalorder %s183, %s186
      %p195 = scmp.eq.s32.totalorder %s21, 3
      %p196 = por %p194, %p195
      %p197 = scmp.ne.s32.totalorder %s186, %s187
      %p198 = scmp.eq.s32.totalorder %s21, 0
      %p199 = por %p197, %p198
      %p200 = scmp.ne.s32.totalorder %s186, %s187
      %p201 = scmp.eq.s32.totalorder %s22, 3
      %p202 = por %p200, %p201
      %p204 = scmp.ne.s32.totalorder %s187, %s203
      %p205 = scmp.eq.s32.totalorder %s22, 0
      %p206 = por %p204, %p205
      %p207 = scmp.le.s32.totalorder 1, %s16
      %p208 = scmp.lt.s32.totalorder %s16, 5
      %p209 = pnand %p207, %p208
      %p210 = pneg %p209
      // Predicated region
      $region9: #{tpu_custom_call.1} parent=5 // pred_check
        _
      $region10: #{tpu_custom_call.1} parent=5 // pred_check_branch
        %212 = sbr.rel (%p209) target = $region12
      $region11: #{tpu_custom_call.1} parent=5 // pred_region
        %s213 = ssub.s32 %s16, 1
        // Predicated region
        $region13: #{tpu_custom_call.1} parent=11 // pred_check
          %p214 = pneg %p89
        $region14: #{tpu_custom_call.1} parent=11 // pred_check_branch
          %216 = sbr.rel (%p214) target = $region16
        $region15: #{tpu_custom_call.1} parent=11 // pred_region
          _
        $region16: #{tpu_custom_call.1} parent=11 // pred_fallthru
          _
        // Predicated region
        $region17: #{tpu_custom_call.1} parent=11 // pred_check
          %p217 = pneg %p110
        $region18: #{tpu_custom_call.1} parent=11 // pred_check_branch
          %219 = sbr.rel (%p217) target = $region20
        $region19: #{tpu_custom_call.1} parent=11 // pred_region
          _
        $region20: #{tpu_custom_call.1} parent=11 // pred_fallthru
          _
        // Predicated region
        $region21: #{tpu_custom_call.1} parent=11 // pred_check
          %p220 = pneg %p131
        $region22: #{tpu_custom_call.1} parent=11 // pred_check_branch
          %222 = sbr.rel (%p220) target = $region24
        $region23: #{tpu_custom_call.1} parent=11 // pred_region
          _
        $region24: #{tpu_custom_call.1} parent=11 // pred_fallthru
          _
        // Predicated region
        $region25: #{tpu_custom_call.1} parent=11 // pred_check
          %p223 = pneg %p152
        $region26: #{tpu_custom_call.1} parent=11 // pred_check_branch
          %225 = sbr.rel (%p223) target = $region28
        $region27: #{tpu_custom_call.1} parent=11 // pred_region
          _
        $region28: #{tpu_custom_call.1} parent=11 // pred_fallthru
          _
        // Predicated region
        $region29: #{tpu_custom_call.1} parent=11 // pred_check
          %p226 = pneg %p173
        $region30: #{tpu_custom_call.1} parent=11 // pred_check_branch
          %228 = sbr.rel (%p226) target = $region32
        $region31: #{tpu_custom_call.1} parent=11 // pred_region
          _
        $region32: #{tpu_custom_call.1} parent=11 // pred_fallthru
          _
      $region12: #{tpu_custom_call.1} parent=5 // pred_fallthru
        _
      %p229 = scmp.lt.s32.totalorder %s16, 4
      // Predicated region
      $region33: #{tpu_custom_call.1} parent=5 // pred_check
        %p230 = pneg %p229
      $region34: #{tpu_custom_call.1} parent=5 // pred_check_branch
        %232 = sbr.rel (%p230) target = $region36
      $region35: #{tpu_custom_call.1} parent=5 // pred_region
        // Predicated region
        $region37: #{tpu_custom_call.1} parent=35 // pred_check
          %p233 = pneg %p36
        $region38: #{tpu_custom_call.1} parent=35 // pred_check_branch
          %235 = sbr.rel (%p233) target = $region40
        $region39: #{tpu_custom_call.1} parent=35 // pred_region
          %s236 = sand.u32 %s26, 1
          %s237 = sand.u32 %s26, 1
          %s238 = smul.addr %s237, 16
          %s239 = scalar_lea.vmem [#allocation2], %s238
          %s240 = smul.addr %s16, 8
          %s241 = scalar_lea.vmem %s0, %s240
          // Predicated region
          $region41: #{tpu_custom_call.1} parent=39 // pred_check
            _
          $region42: #{tpu_custom_call.1} parent=39 // pred_check_branch
            %243 = sbr.rel (0) target = $region44
          $region43: #{tpu_custom_call.1} parent=39 // pred_region
            // Predicated region
            $region45: #{tpu_custom_call.1} parent=43 // pred_check
              _
            $region46: #{tpu_custom_call.1} parent=43 // pred_check_branch
              %245 = sbr.rel (0) target = $region48
            $region47: #{tpu_custom_call.1} parent=43 // pred_region
              // Predicated region
              $region60: #{tpu_custom_call.1} parent=47 // pred_check
                _
              $region61: #{tpu_custom_call.1} parent=47 // pred_check_branch
                %262 = sbr.rel (0) target = $region63
              $region62: #{tpu_custom_call.1} parent=47 // pred_region
                loop: start=0, step=1, limit=1
                $region64: #{tpu_custom_call.1} parent=62 // loop_pre_header
                  _
                $region65: #{tpu_custom_call.1} parent=62 // loop_header
                  %s264 = sphi 0, %s268
                  %p265 = scmp.ge.s32.totalorder %s264, 1
                  %s269 = sphi %s241, %s241
                  %s270 = sphi %s239, %s239
                $region66: #{tpu_custom_call.1} parent=62 // loop_header_branch
                  %267 = sbr.rel (%p265) target = $region70
                $region67: #{tpu_custom_call.1} parent=62 // loop_body
                  %v271 = vld [vmem:[%s269] sm:$0xff]
                  %272 = vst [vmem:[%s270] sm:$0xff] %v271
                  %v273 = vld [vmem:[%s269 + $0x20] sm:$0xff]
                  %274 = vst [vmem:[%s270 + $0x8] sm:$0xff] %v273
                $region68: #{tpu_custom_call.1} parent=62 // loop_footer
                  %s268 = sadd.s32 1, %s264
                $region69: #{tpu_custom_call.1} parent=62 // loop_footer_branch
                  %263 = sbr.rel target = $region65
                $region70: #{tpu_custom_call.1} parent=62 // loop_exit
                  _
              $region63: #{tpu_custom_call.1} parent=47 // pred_fallthru
                _
              // Predicated region
              $region71: #{tpu_custom_call.1} parent=47 // pred_check
                _
              $region72: #{tpu_custom_call.1} parent=47 // pred_check_branch
                %276 = sbr.rel target = $region74
              $region73: #{tpu_custom_call.1} parent=47 // pred_region
                _
              $region74: #{tpu_custom_call.1} parent=47 // pred_fallthru
                _
            $region48: #{tpu_custom_call.1} parent=43 // pred_fallthru
              _
            // Predicated region
            $region49: #{tpu_custom_call.1} parent=43 // pred_check
              _
            $region50: #{tpu_custom_call.1} parent=43 // pred_check_branch
              %247 = sbr.rel target = $region52
            $region51: #{tpu_custom_call.1} parent=43 // pred_region
              loop: start=0, step=1, limit=1
              $region53: #{tpu_custom_call.1} parent=51 // loop_pre_header
                _
              $region54: #{tpu_custom_call.1} parent=51 // loop_header
                %s250 = sphi 0, %s254
                %p251 = scmp.ge.s32.totalorder %s250, 1
                %s255 = sphi %s241, %s241
                %s256 = sphi %s239, %s239
              $region55: #{tpu_custom_call.1} parent=51 // loop_header_branch
                %253 = sbr.rel (%p251) target = $region59
              $region56: #{tpu_custom_call.1} parent=51 // loop_body
                %v257 = vld [vmem:[%s255] sm:$0xff]
                %258 = vst [vmem:[%s256] sm:$0xff] %v257
                %v259 = vld [vmem:[%s255 + $0x20] sm:$0xff]
                %260 = vst [vmem:[%s256 + $0x8] sm:$0xff] %v259
              $region57: #{tpu_custom_call.1} parent=51 // loop_footer
                %s254 = sadd.s32 1, %s250
              $region58: #{tpu_custom_call.1} parent=51 // loop_footer_branch
                %249 = sbr.rel target = $region54
              $region59: #{tpu_custom_call.1} parent=51 // loop_exit
                _
            $region52: #{tpu_custom_call.1} parent=43 // pred_fallthru
              _
          $region44: #{tpu_custom_call.1} parent=39 // pred_fallthru
            _
          %277 = vnop
        $region40: #{tpu_custom_call.1} parent=35 // pred_fallthru
          _
        // Predicated region
        $region75: #{tpu_custom_call.1} parent=35 // pred_check
          %p278 = pneg %p62
        $region76: #{tpu_custom_call.1} parent=35 // pred_check_branch
          %280 = sbr.rel (%p278) target = $region78
        $region77: #{tpu_custom_call.1} parent=35 // pred_region
          %p281 = scmp.lt.s32.totalorder %s16, 3
          %s282 = scalar_select %p281, %s16, 3
          %s283 = scalar_lea.vmem %s1, %s282
        $region78: #{tpu_custom_call.1} parent=35 // pred_fallthru
          _
      $region36: #{tpu_custom_call.1} parent=5 // pred_fallthru
        _
      %p284 = scmp.le.s32.totalorder 1, %s16
      %p285 = scmp.lt.s32.totalorder %s16, 5
      %p286 = pnand %p284, %p285
      %p287 = pneg %p286
      // Predicated region
      $region79: #{tpu_custom_call.1} parent=5 // pred_check
        _
      $region80: #{tpu_custom_call.1} parent=5 // pred_check_branch
        %289 = sbr.rel (%p286) target = $region82
      $region81: #{tpu_custom_call.1} parent=5 // pred_region
        %s290 = ssub.s32 %s16, 1
        %s291 = sand.u32 %s29, 1
        %s292 = sand.u32 %s29, 1
        %s293 = smul.addr %s292, 16
        %s294 = scalar_lea.vmem [#allocation2], %s293
        // Predicated region
        $region83: #{tpu_custom_call.1} parent=81 // pred_check
          %p295 = pneg %p42
        $region84: #{tpu_custom_call.1} parent=81 // pred_check_branch
          %297 = sbr.rel (%p295) target = $region86
        $region85: #{tpu_custom_call.1} parent=81 // pred_region
          _
        $region86: #{tpu_custom_call.1} parent=81 // pred_fallthru
          _
        %s298 = sand.u32 %s29, 1
        %s299 = sand.u32 %s29, 1
        %s300 = smul.addr %s299, 16
        %s301 = scalar_lea.vmem [#allocation2], %s300
        %p302 = pneg %p42
        %p303 = pneg %p39
        %p304 = scmp.lt.s32.totalorder %s21, 3
        %s305 = scalar_select %p304, %s21, 3
        %s306 = scalar_lea.vmem %s1, %s305
        %p307 = pneg %p68
        %p308 = pneg %p65
        %p309 = pneg %p89
        %p310 = pneg %p86
        %p311 = pneg %p110
        %p312 = pneg %p107
        %p313 = pneg %p131
        %p314 = pneg %p128
        %p315 = pneg %p152
        %p316 = pneg %p149
        %p317 = pneg %p173
        %p318 = pneg %p170
        %p319 = pneg %p199
        %p320 = pneg %p196
        %s321 = sand.u32 %s186, 1
        %s322 = scalar_lea.sflag [#allocation4], %s321
        %s323 = sand.u32 %s186, 1
        %s324 = smul.addr %s323, 16
        %s325 = scalar_lea.vmem [#allocation3], %s324
        %p326 = scmp.lt.s32.totalorder %s21, 3
        %s327 = scalar_select %p326, %s21, 3
        %s328 = scalar_lea.vmem %s1, %s327
        %v329 = vld [vmem:[%s294] sm:$0xff]
        %v330 = vld [vmem:[%s294 + $0x8] sm:$0xff]
        %v331 = vld [vmem:[%s328] sm:$0x1]
        %v332 = vld [vmem:[%s2] sm:$0xff]
        %v333 = vld [vmem:[%s2 + $0x8] sm:$0xff]
        %v334 = vld [vmem:[%s2 + $0x10] sm:$0xff]
        %v335 = vld [vmem:[%s2 + $0x18] sm:$0xff]
        %v336 = vld [vmem:[%s2 + $0x20] sm:$0xff]
        %v337 = vld [vmem:[%s2 + $0x28] sm:$0xff]
        %v338 = vld [vmem:[%s2 + $0x30] sm:$0xff]
        %v339 = vld [vmem:[%s2 + $0x38] sm:$0xff]
        %v340 = vld [vmem:[%s2 + $0x40] sm:$0xff]
        %v341 = vld [vmem:[%s2 + $0x48] sm:$0xff]
        %v342 = vld [vmem:[%s2 + $0x50] sm:$0xff]
        %v343 = vld [vmem:[%s2 + $0x58] sm:$0xff]
        %v344 = vld [vmem:[%s2 + $0x60] sm:$0xff]
        %v345 = vld [vmem:[%s2 + $0x68] sm:$0xff]
        %v346 = vld [vmem:[%s2 + $0x70] sm:$0xff]
        %v347 = vld [vmem:[%s2 + $0x78] sm:$0xff]
        %v348 = vld [vmem:[%s3] sm:$0xff]
        %v349 = vld [vmem:[%s3 + $0x8] sm:$0xff]
        %v350 = vld [vmem:[%s3 + $0x10] sm:$0xff]
        %v351 = vld [vmem:[%s3 + $0x18] sm:$0xff]
        %v352 = vld [vmem:[%s3 + $0x20] sm:$0xff]
        %v353 = vld [vmem:[%s3 + $0x28] sm:$0xff]
        %v354 = vld [vmem:[%s3 + $0x30] sm:$0xff]
        %v355 = vld [vmem:[%s3 + $0x38] sm:$0xff]
        %v356 = vld [vmem:[%s3 + $0x40] sm:$0xff]
        %v357 = vld [vmem:[%s3 + $0x48] sm:$0xff]
        %v358 = vld [vmem:[%s3 + $0x50] sm:$0xff]
        %v359 = vld [vmem:[%s3 + $0x58] sm:$0xff]
        %v360 = vld [vmem:[%s3 + $0x60] sm:$0xff]
        %v361 = vld [vmem:[%s3 + $0x68] sm:$0xff]
        %v362 = vld [vmem:[%s3 + $0x70] sm:$0xff]
        %v363 = vld [vmem:[%s3 + $0x78] sm:$0xff]
        %365 = vset.pattern.permute.xlu0 0
        %366 = vperm.xlu0 %365, %v348
        %v367 = vpop.permute.xlu0 %366
        %370 = vset.pattern.permute.xlu0 0
        %371 = vperm.xlu0 %370, %v349
        %v372 = vpop.permute.xlu0 %371
        %375 = vset.pattern.permute.xlu0 0
        %376 = vperm.xlu0 %375, %v350
        %v377 = vpop.permute.xlu0 %376
        %380 = vset.pattern.permute.xlu0 0
        %381 = vperm.xlu0 %380, %v351
        %v382 = vpop.permute.xlu0 %381
        %385 = vset.pattern.permute.xlu0 0
        %386 = vperm.xlu0 %385, %v352
        %v387 = vpop.permute.xlu0 %386
        %390 = vset.pattern.permute.xlu0 0
        %391 = vperm.xlu0 %390, %v353
        %v392 = vpop.permute.xlu0 %391
        %395 = vset.pattern.permute.xlu0 0
        %396 = vperm.xlu0 %395, %v354
        %v397 = vpop.permute.xlu0 %396
        %400 = vset.pattern.permute.xlu0 0
        %401 = vperm.xlu0 %400, %v355
        %v402 = vpop.permute.xlu0 %401
        %405 = vset.pattern.permute.xlu0 0
        %406 = vperm.xlu0 %405, %v356
        %v407 = vpop.permute.xlu0 %406
        %410 = vset.pattern.permute.xlu0 0
        %411 = vperm.xlu0 %410, %v357
        %v412 = vpop.permute.xlu0 %411
        %415 = vset.pattern.permute.xlu0 0
        %416 = vperm.xlu0 %415, %v358
        %v417 = vpop.permute.xlu0 %416
        %420 = vset.pattern.permute.xlu0 0
        %421 = vperm.xlu0 %420, %v359
        %v422 = vpop.permute.xlu0 %421
        %425 = vset.pattern.permute.xlu0 0
        %426 = vperm.xlu0 %425, %v360
        %v427 = vpop.permute.xlu0 %426
        %430 = vset.pattern.permute.xlu0 0
        %431 = vperm.xlu0 %430, %v361
        %v432 = vpop.permute.xlu0 %431
        %435 = vset.pattern.permute.xlu0 0
        %436 = vperm.xlu0 %435, %v362
        %v437 = vpop.permute.xlu0 %436
        %440 = vset.pattern.permute.xlu0 0
        %441 = vperm.xlu0 %440, %v363
        %v442 = vpop.permute.xlu0 %441
        %v445 = vlaneseq
        %v446 = vshrl.u32 %v445, 7
        %v447 = vsub.s32 0, %v446
        %v448 = vrot.slane %v331, %v447
        %v450 = vmul.f32 %v367, %v448
        %v451 = vmul.f32 %v372, %v448
        %v452 = vmul.f32 %v377, %v448
        %v453 = vmul.f32 %v382, %v448
        %v454 = vmul.f32 %v387, %v448
        %v455 = vmul.f32 %v392, %v448
        %v456 = vmul.f32 %v397, %v448
        %v457 = vmul.f32 %v402, %v448
        %v458 = vmul.f32 %v407, %v448
        %v459 = vmul.f32 %v412, %v448
        %v460 = vmul.f32 %v417, %v448
        %v461 = vmul.f32 %v422, %v448
        %v462 = vmul.f32 %v427, %v448
        %v463 = vmul.f32 %v432, %v448
        %v464 = vmul.f32 %v437, %v448
        %v465 = vmul.f32 %v442, %v448
        %vm466 = vcmask 130048
        %v468 = vsel %vm466, %v332, 0
        %v471 = vsel %vm466, %v333, 0
        %v474 = vsel %vm466, %v334, 0
        %v477 = vsel %vm466, %v335, 0
        %v480 = vsel %vm466, %v336, 0
        %v483 = vsel %vm466, %v337, 0
        %v486 = vsel %vm466, %v338, 0
        %v489 = vsel %vm466, %v339, 0
        %v492 = vsel %vm466, %v340, 0
        %v495 = vsel %vm466, %v341, 0
        %v498 = vsel %vm466, %v342, 0
        %v501 = vsel %vm466, %v343, 0
        %v504 = vsel %vm466, %v344, 0
        %v507 = vsel %vm466, %v345, 0
        %v510 = vsel %vm466, %v346, 0
        %v513 = vsel %vm466, %v347, 0
        %515 = vmatprep.subr.mxu0 0.0
        %516 = vmatpush1.msra.mxu0 %v329
        %517 = vmatprep.subr.mxu0 0.0
        %518 = vmatpush1.msra.mxu0 %v330
        %519 = vmatprep.subr.mxu0 0.0
        %520 = vmatpush1.msra.mxu0 0.0
        %521 = vmatprep.subr.mxu0 0.0
        %522 = vmatpush1.msra.mxu0 0.0
        %523 = vmatprep.subr.mxu0 0.0
        %524 = vmatpush1.msra.mxu0 0.0
        %525 = vmatprep.subr.mxu0 0.0
        %526 = vmatpush1.msra.mxu0 0.0
        %527 = vmatprep.subr.mxu0 0.0
        %528 = vmatpush1.msra.mxu0 0.0
        %529 = vmatprep.subr.mxu0 0.0
        %530 = vmatpush1.msra.mxu0 0.0
        %531 = vmatprep.subr.mxu0 0.0
        %532 = vmatpush1.msra.mxu0 0.0
        %533 = vmatprep.subr.mxu0 0.0
        %534 = vmatpush1.msra.mxu0 0.0
        %535 = vmatprep.subr.mxu0 0.0
        %536 = vmatpush1.msra.mxu0 0.0
        %537 = vmatprep.subr.mxu0 0.0
        %538 = vmatpush1.msra.mxu0 0.0
        %539 = vmatprep.subr.mxu0 0.0
        %540 = vmatpush1.msra.mxu0 0.0
        %541 = vmatprep.subr.mxu0 0.0
        %542 = vmatpush1.msra.mxu0 0.0
        %543 = vmatprep.subr.mxu0 0.0
        %544 = vmatpush1.msra.mxu0 0.0
        %545 = vmatprep.subr.mxu0 0.0
        %546 = vmatpush1.msra.mxu0 0.0
        %547 = vmatprep.subr.mxu0 0.0
        %548 = vmatpush1.msra.mxu0 0.0
        %549 = vmatprep.subr.mxu0 0.0
        %550 = vmatpush1.msra.mxu0 0.0
        %551 = vmatprep.subr.mxu0 0.0
        %552 = vmatpush1.msra.mxu0 0.0
        %553 = vmatprep.subr.mxu0 0.0
        %554 = vmatpush1.msra.mxu0 0.0
        %555 = vmatprep.subr.mxu0 0.0
        %556 = vmatpush1.msra.mxu0 0.0
        %557 = vmatprep.subr.mxu0 0.0
        %558 = vmatpush1.msra.mxu0 0.0
        %559 = vmatprep.subr.mxu0 0.0
        %560 = vmatpush1.msra.mxu0 0.0
        %561 = vmatprep.subr.mxu0 0.0
        %562 = vmatpush1.msra.mxu0 0.0
        %563 = vmatprep.subr.mxu0 0.0
        %564 = vmatpush1.msra.mxu0 0.0
        %565 = vmatprep.subr.mxu0 0.0
        %566 = vmatpush1.msra.mxu0 0.0
        %567 = vmatprep.subr.mxu0 0.0
        %568 = vmatpush1.msra.mxu0 0.0
        %569 = vmatprep.subr.mxu0 0.0
        %570 = vmatpush1.msra.mxu0 0.0
        %571 = vmatprep.subr.mxu0 0.0
        %572 = vmatpush1.msra.mxu0 0.0
        %573 = vmatprep.subr.mxu0 0.0
        %574 = vmatpush1.msra.mxu0 0.0
        %575 = vmatprep.subr.mxu0 0.0
        %576 = vmatpush1.msra.mxu0 0.0
        %577 = vmatprep.subr.mxu0 0.0
        %578 = vmatpush1.msra.mxu0 0.0
        %579 = vmatprep.mubr.f32.mxu0 0.0
        %580 = vmatmul.mubr.f32.gmra.mrb[0].mxu0 %v468
        %v581 = vpop.f32.mrb[0].mxu0
        %v582 = vadd.f32 %v450, %v581
        %v583 = vpop.f32.mrb[0].mxu0
        %584 = vmatprep.mubr.f32.mxu0 0.0
        %585 = vmatmul.mubr.f32.gmra.mrb[0].mxu0 %v471
        %v586 = vpop.f32.mrb[0].mxu0
        %v587 = vadd.f32 %v451, %v586
        %v588 = vpop.f32.mrb[0].mxu0
        %589 = vmatprep.mubr.f32.mxu0 0.0
        %590 = vmatmul.mubr.f32.gmra.mrb[0].mxu0 %v474
        %v591 = vpop.f32.mrb[0].mxu0
        %v592 = vadd.f32 %v452, %v591
        %v593 = vpop.f32.mrb[0].mxu0
        %594 = vmatprep.mubr.f32.mxu0 0.0
        %595 = vmatmul.mubr.f32.gmra.mrb[0].mxu0 %v477
        %v596 = vpop.f32.mrb[0].mxu0
        %v597 = vadd.f32 %v453, %v596
        %v598 = vpop.f32.mrb[0].mxu0
        %599 = vmatprep.mubr.f32.mxu0 0.0
        %600 = vmatmul.mubr.f32.gmra.mrb[0].mxu0 %v480
        %v601 = vpop.f32.mrb[0].mxu0
        %v602 = vadd.f32 %v454, %v601
        %v603 = vpop.f32.mrb[0].mxu0
        %604 = vmatprep.mubr.f32.mxu0 0.0
        %605 = vmatmul.mubr.f32.gmra.mrb[0].mxu0 %v483
        %v606 = vpop.f32.mrb[0].mxu0
        %v607 = vadd.f32 %v455, %v606
        %v608 = vpop.f32.mrb[0].mxu0
        %609 = vmatprep.mubr.f32.mxu0 0.0
        %610 = vmatmul.mubr.f32.gmra.mrb[0].mxu0 %v486
        %v611 = vpop.f32.mrb[0].mxu0
        %v612 = vadd.f32 %v456, %v611
        %v613 = vpop.f32.mrb[0].mxu0
        %614 = vmatprep.mubr.f32.mxu0 0.0
        %615 = vmatmul.mubr.f32.gmra.mrb[0].mxu0 %v489
        %v616 = vpop.f32.mrb[0].mxu0
        %v617 = vadd.f32 %v457, %v616
        %v618 = vpop.f32.mrb[0].mxu0
        %619 = vmatprep.mubr.f32.mxu0 0.0
        %620 = vmatmul.mubr.f32.gmra.mrb[0].mxu0 %v492
        %v621 = vpop.f32.mrb[0].mxu0
        %v622 = vadd.f32 %v458, %v621
        %v623 = vpop.f32.mrb[0].mxu0
        %624 = vmatprep.mubr.f32.mxu0 0.0
        %625 = vmatmul.mubr.f32.gmra.mrb[0].mxu0 %v495
        %v626 = vpop.f32.mrb[0].mxu0
        %v627 = vadd.f32 %v459, %v626
        %v628 = vpop.f32.mrb[0].mxu0
        %629 = vmatprep.mubr.f32.mxu0 0.0
        %630 = vmatmul.mubr.f32.gmra.mrb[0].mxu0 %v498
        %v631 = vpop.f32.mrb[0].mxu0
        %v632 = vadd.f32 %v460, %v631
        %v633 = vpop.f32.mrb[0].mxu0
        %634 = vmatprep.mubr.f32.mxu0 0.0
        %635 = vmatmul.mubr.f32.gmra.mrb[0].mxu0 %v501
        %v636 = vpop.f32.mrb[0].mxu0
        %v637 = vadd.f32 %v461, %v636
        %v638 = vpop.f32.mrb[0].mxu0
        %639 = vmatprep.mubr.f32.mxu0 0.0
        %640 = vmatmul.mubr.f32.gmra.mrb[0].mxu0 %v504
        %v641 = vpop.f32.mrb[0].mxu0
        %v642 = vadd.f32 %v462, %v641
        %v643 = vpop.f32.mrb[0].mxu0
        %644 = vmatprep.mubr.f32.mxu0 0.0
        %645 = vmatmul.mubr.f32.gmra.mrb[0].mxu0 %v507
        %v646 = vpop.f32.mrb[0].mxu0
        %v647 = vadd.f32 %v463, %v646
        %v648 = vpop.f32.mrb[0].mxu0
        %649 = vmatprep.mubr.f32.mxu0 0.0
        %650 = vmatmul.mubr.f32.gmra.mrb[0].mxu0 %v510
        %v651 = vpop.f32.mrb[0].mxu0
        %v652 = vadd.f32 %v464, %v651
        %v653 = vpop.f32.mrb[0].mxu0
        %654 = vmatprep.mubr.f32.mxu0 0.0
        %655 = vmatmul.mubr.f32.gmra.mrb[0].mxu0 %v513
        %v656 = vpop.f32.mrb[0].mxu0
        %v657 = vadd.f32 %v465, %v656
        %v658 = vpop.f32.mrb[0].mxu0
        %659 = vdwg.mxu0
        %v660 = vld [vmem:[%s4] sm:$0xff]
        %v661 = vld [vmem:[%s4 + $0x8] sm:$0xff]
        %v662 = vld [vmem:[%s4 + $0x10] sm:$0xff]
        %v663 = vld [vmem:[%s4 + $0x18] sm:$0xff]
        %v664 = vld [vmem:[%s4 + $0x20] sm:$0xff]
        %v665 = vld [vmem:[%s4 + $0x28] sm:$0xff]
        %v666 = vld [vmem:[%s4 + $0x30] sm:$0xff]
        %v667 = vld [vmem:[%s4 + $0x38] sm:$0xff]
        %v668 = vld [vmem:[%s4 + $0x40] sm:$0xff]
        %v669 = vld [vmem:[%s4 + $0x48] sm:$0xff]
        %v670 = vld [vmem:[%s4 + $0x50] sm:$0xff]
        %v671 = vld [vmem:[%s4 + $0x58] sm:$0xff]
        %v672 = vld [vmem:[%s4 + $0x60] sm:$0xff]
        %v673 = vld [vmem:[%s4 + $0x68] sm:$0xff]
        %v674 = vld [vmem:[%s4 + $0x70] sm:$0xff]
        %v675 = vld [vmem:[%s4 + $0x78] sm:$0xff]
        %677 = vset.pattern.permute.xlu0 0
        %678 = vperm.xlu0 %677, %v660
        %v679 = vpop.permute.xlu0 %678
        %682 = vset.pattern.permute.xlu0 0
        %683 = vperm.xlu0 %682, %v661
        %v684 = vpop.permute.xlu0 %683
        %687 = vset.pattern.permute.xlu0 0
        %688 = vperm.xlu0 %687, %v662
        %v689 = vpop.permute.xlu0 %688
        %692 = vset.pattern.permute.xlu0 0
        %693 = vperm.xlu0 %692, %v663
        %v694 = vpop.permute.xlu0 %693
        %697 = vset.pattern.permute.xlu0 0
        %698 = vperm.xlu0 %697, %v664
        %v699 = vpop.permute.xlu0 %698
        %702 = vset.pattern.permute.xlu0 0
        %703 = vperm.xlu0 %702, %v665
        %v704 = vpop.permute.xlu0 %703
        %707 = vset.pattern.permute.xlu0 0
        %708 = vperm.xlu0 %707, %v666
        %v709 = vpop.permute.xlu0 %708
        %712 = vset.pattern.permute.xlu0 0
        %713 = vperm.xlu0 %712, %v667
        %v714 = vpop.permute.xlu0 %713
        %717 = vset.pattern.permute.xlu0 0
        %718 = vperm.xlu0 %717, %v668
        %v719 = vpop.permute.xlu0 %718
        %722 = vset.pattern.permute.xlu0 0
        %723 = vperm.xlu0 %722, %v669
        %v724 = vpop.permute.xlu0 %723
        %727 = vset.pattern.permute.xlu0 0
        %728 = vperm.xlu0 %727, %v670
        %v729 = vpop.permute.xlu0 %728
        %732 = vset.pattern.permute.xlu0 0
        %733 = vperm.xlu0 %732, %v671
        %v734 = vpop.permute.xlu0 %733
        %737 = vset.pattern.permute.xlu0 0
        %738 = vperm.xlu0 %737, %v672
        %v739 = vpop.permute.xlu0 %738
        %742 = vset.pattern.permute.xlu0 0
        %743 = vperm.xlu0 %742, %v673
        %v744 = vpop.permute.xlu0 %743
        %747 = vset.pattern.permute.xlu0 0
        %748 = vperm.xlu0 %747, %v674
        %v749 = vpop.permute.xlu0 %748
        %752 = vset.pattern.permute.xlu0 0
        %753 = vperm.xlu0 %752, %v675
        %v754 = vpop.permute.xlu0 %753
        %v756 = vadd.f32 %v582, %v679
        %v757 = vadd.f32 %v587, %v684
        %v758 = vadd.f32 %v592, %v689
        %v759 = vadd.f32 %v597, %v694
        %v760 = vadd.f32 %v602, %v699
        %v761 = vadd.f32 %v607, %v704
        %v762 = vadd.f32 %v612, %v709
        %v763 = vadd.f32 %v617, %v714
        %v764 = vadd.f32 %v622, %v719
        %v765 = vadd.f32 %v627, %v724
        %v766 = vadd.f32 %v632, %v729
        %v767 = vadd.f32 %v637, %v734
        %v768 = vadd.f32 %v642, %v739
        %v769 = vadd.f32 %v647, %v744
        %v770 = vadd.f32 %v652, %v749
        %v771 = vadd.f32 %v657, %v754
        %v772 = vmax.f32 %v756, 0.0
        %v773 = vmax.f32 %v757, 0.0
        %v774 = vmax.f32 %v758, 0.0
        %v775 = vmax.f32 %v759, 0.0
        %v776 = vmax.f32 %v760, 0.0
        %v777 = vmax.f32 %v761, 0.0
        %v778 = vmax.f32 %v762, 0.0
        %v779 = vmax.f32 %v763, 0.0
        %v780 = vmax.f32 %v764, 0.0
        %v781 = vmax.f32 %v765, 0.0
        %v782 = vmax.f32 %v766, 0.0
        %v783 = vmax.f32 %v767, 0.0
        %v784 = vmax.f32 %v768, 0.0
        %v785 = vmax.f32 %v769, 0.0
        %v786 = vmax.f32 %v770, 0.0
        %v787 = vmax.f32 %v771, 0.0
        %v788 = vld [vmem:[%s5] sm:$0xff]
        %v789 = vld [vmem:[%s5 + $0x8] sm:$0xff]
        %v790 = vld [vmem:[%s6] sm:$0xff]
        %v791 = vld [vmem:[%s6 + $0x8] sm:$0xff]
        %793 = vset.pattern.permute.xlu0 0
        %794 = vperm.xlu0 %793, %v790
        %v795 = vpop.permute.xlu0 %794
        %798 = vset.pattern.permute.xlu0 0
        %799 = vperm.xlu0 %798, %v791
        %v800 = vpop.permute.xlu0 %799
        %802 = vmatprep.subr.mxu0 0.0
        %803 = vmatpush1.msra.mxu0 %v772
        %804 = vmatprep.subr.mxu0 0.0
        %805 = vmatpush1.msra.mxu0 %v773
        %806 = vmatprep.subr.mxu0 0.0
        %807 = vmatpush1.msra.mxu0 %v774
        %808 = vmatprep.subr.mxu0 0.0
        %809 = vmatpush1.msra.mxu0 %v775
        %810 = vmatprep.subr.mxu0 0.0
        %811 = vmatpush1.msra.mxu0 %v776
        %812 = vmatprep.subr.mxu0 0.0
        %813 = vmatpush1.msra.mxu0 %v777
        %814 = vmatprep.subr.mxu0 0.0
        %815 = vmatpush1.msra.mxu0 %v778
        %816 = vmatprep.subr.mxu0 0.0
        %817 = vmatpush1.msra.mxu0 %v779
        %818 = vmatprep.subr.mxu0 0.0
        %819 = vmatpush1.msra.mxu0 %v780
        %820 = vmatprep.subr.mxu0 0.0
        %821 = vmatpush1.msra.mxu0 %v781
        %822 = vmatprep.subr.mxu0 0.0
        %823 = vmatpush1.msra.mxu0 %v782
        %824 = vmatprep.subr.mxu0 0.0
        %825 = vmatpush1.msra.mxu0 %v783
        %826 = vmatprep.subr.mxu0 0.0
        %827 = vmatpush1.msra.mxu0 %v784
        %828 = vmatprep.subr.mxu0 0.0
        %829 = vmatpush1.msra.mxu0 %v785
        %830 = vmatprep.subr.mxu0 0.0
        %831 = vmatpush1.msra.mxu0 %v786
        %832 = vmatprep.subr.mxu0 0.0
        %833 = vmatpush1.msra.mxu0 %v787
        %834 = vmatprep.subr.mxu0 0.0
        %835 = vmatpush1.msra.mxu0 0.0
        %836 = vmatprep.subr.mxu0 0.0
        %837 = vmatpush1.msra.mxu0 0.0
        %838 = vmatprep.subr.mxu0 0.0
        %839 = vmatpush1.msra.mxu0 0.0
        %840 = vmatprep.subr.mxu0 0.0
        %841 = vmatpush1.msra.mxu0 0.0
        %842 = vmatprep.subr.mxu0 0.0
        %843 = vmatpush1.msra.mxu0 0.0
        %844 = vmatprep.subr.mxu0 0.0
        %845 = vmatpush1.msra.mxu0 0.0
        %846 = vmatprep.subr.mxu0 0.0
        %847 = vmatpush1.msra.mxu0 0.0
        %848 = vmatprep.subr.mxu0 0.0
        %849 = vmatpush1.msra.mxu0 0.0
        %850 = vmatprep.subr.mxu0 0.0
        %851 = vmatpush1.msra.mxu0 0.0
        %852 = vmatprep.subr.mxu0 0.0
        %853 = vmatpush1.msra.mxu0 0.0
        %854 = vmatprep.subr.mxu0 0.0
        %855 = vmatpush1.msra.mxu0 0.0
        %856 = vmatprep.subr.mxu0 0.0
        %857 = vmatpush1.msra.mxu0 0.0
        %858 = vmatprep.subr.mxu0 0.0
        %859 = vmatpush1.msra.mxu0 0.0
        %860 = vmatprep.subr.mxu0 0.0
        %861 = vmatpush1.msra.mxu0 0.0
        %862 = vmatprep.subr.mxu0 0.0
        %863 = vmatpush1.msra.mxu0 0.0
        %864 = vmatprep.subr.mxu0 0.0
        %865 = vmatpush1.msra.mxu0 0.0
        %866 = vmatprep.mubr.f32.mxu0 0.0
        %867 = vmatmul.mubr.f32.gmra.mrb[0].mxu0 %v788
        %v868 = vpop.f32.mrb[0].mxu0
        %v869 = vadd.f32 %v795, %v868
        %v870 = vpop.f32.mrb[0].mxu0
        %871 = vmatprep.mubr.f32.mxu0 0.0
        %872 = vmatmul.mubr.f32.gmra.mrb[0].mxu0 %v789
        %v873 = vpop.f32.mrb[0].mxu0
        %v874 = vadd.f32 %v800, %v873
        %v875 = vpop.f32.mrb[0].mxu0
        %876 = vdwg.mxu0
        %877 = vst [vmem:[%s325] sm:$0xff] %v869
        %878 = vst [vmem:[%s325 + $0x8] sm:$0xff] %v874
        %s879 = sand.u32 %s186, 1
        %s880 = scalar_lea.sflag [#allocation4], %s879
        %s881 = sand.u32 %s186, 1
        %s882 = smul.addr %s881, 16
        %s883 = scalar_lea.vmem [#allocation3], %s882
        // Predicated region
        $region87: #{tpu_custom_call.1} parent=81 // pred_check
          %p884 = pneg %p196
        $region88: #{tpu_custom_call.1} parent=81 // pred_check_branch
          %886 = sbr.rel (%p884) target = $region90
        $region89: #{tpu_custom_call.1} parent=81 // pred_region
          %s888 = ssub.s32 256, 256
          %889 = vsyncadd %s880, %s888
          %s890 = smul.addr %s21, 128
          %s891 = scalar_lea.hbm %s7, %s890
          %s892 = sshll.u32 %s883, 4
          %s893 = int_to_ptr.vmem [resolvable:$true] %s892
          %898 = dma.vmem_to_hbm [thread:$0]  %s893, 256, %s891, %s880, 128, 512, 8
        $region90: #{tpu_custom_call.1} parent=81 // pred_fallthru
          _
      $region82: #{tpu_custom_call.1} parent=5 // pred_fallthru
        _
      %p899 = scmp.le.s32.totalorder 2, %s16
      // Predicated region
      $region91: #{tpu_custom_call.1} parent=5 // pred_check
        %p900 = pneg %p899
      $region92: #{tpu_custom_call.1} parent=5 // pred_check_branch
        %902 = sbr.rel (%p900) target = $region94
      $region93: #{tpu_custom_call.1} parent=5 // pred_region
        %s903 = ssub.s32 %s16, 2
        // Predicated region
        $region95: #{tpu_custom_call.1} parent=93 // pred_check
          %p904 = pneg %p202
        $region96: #{tpu_custom_call.1} parent=93 // pred_check_branch
          %906 = sbr.rel (%p904) target = $region98
        $region97: #{tpu_custom_call.1} parent=93 // pred_region
          %s907 = sand.u32 %s187, 1
          %s908 = scalar_lea.sflag [#allocation4], %s907
          %s909 = sand.u32 %s187, 1
          %s910 = smul.addr %s909, 16
          %s911 = scalar_lea.vmem [#allocation3], %s910
          %912 = dma.done %s908, 256
        $region98: #{tpu_custom_call.1} parent=93 // pred_fallthru
          _
      $region94: #{tpu_custom_call.1} parent=5 // pred_fallthru
        _
    $region6: #{tpu_custom_call.1} parent=1 // loop_footer
      %s20 = sadd.s32 1, %s16
    $region7: #{tpu_custom_call.1} parent=1 // loop_footer_branch
      %15 = sbr.rel target = $region3
    $region8: #{tpu_custom_call.1} parent=1 // loop_exit
      _
    %913 = vsyncpa [#allocation4], 1
    %s914 = scalar_lea.sflag [#allocation4], 1
    %915 = vsyncpa %s914, 1

</llo_original>
